<compile_context>
chip_gen: v5e
topology: v5e:2x2
jax: 0.10.0
libtpu: 0.0.40
codegen_flags: <defaults>
</compile_context>

<pallas_src>
import functools

import jax
import jax.numpy as jnp
from jax.experimental import pallas as pl
from jax.experimental.pallas import tpu as pltpu

LANE = 128
SUBLANE = 8
MAX_BLOCK_ROWS = 4096   # (4096, 128) f32 = 2 MiB per stream per pipeline buffer
CHUNK_ROWS = 512        # in-kernel strip-mine chunk (bounds elementwise temps)


def _cdiv(a, b):
    return (a + b - 1) // b


def _round_up(a, b):
    return _cdiv(a, b) * b


def _row_align(*dtypes):
    """Sublane alignment for the block rows given the streamed dtypes."""
    align = SUBLANE
    for dt in dtypes:
        bits = jnp.dtype(dt).itemsize * 8
        align = max(align, (32 // max(bits, 1)) * SUBLANE)  # f32->8, bf16->16, 8-bit->32
    return align


def _choose_tiling(rows, align):
    """Balanced (tile_m, chunk_rows, n_chunks, num_blocks) for `rows` of 128 lanes."""
    # >= 2 blocks whenever possible so ("parallel",) feeds both TCs on v7x.
    nb = max(_cdiv(rows, MAX_BLOCK_ROWS), 2 if rows >= 2 * align else 1)
    tile_cand = _cdiv(rows, nb)
    n_chunks = max(1, _cdiv(tile_cand, CHUNK_ROWS))
    chunk_rows = _round_up(_cdiv(tile_cand, n_chunks), align)
    tile_m = chunk_rows * n_chunks
    num_blocks = _cdiv(rows, tile_m)
    return tile_m, chunk_rows, n_chunks, num_blocks


def _compiler_params():
    return pltpu.CompilerParams(
        dimension_semantics=("parallel",),   # independent blocks -> both TCs on v7x
        vmem_limit_bytes=48 * 1024 * 1024,   # headroom for 2 MiB streams; < v7x 64 MiB physical
    )


def _focal_elementwise(x, t, alpha, gamma):
    """Per-element sigmoid focal loss, f32 in / f32 out (kernel-side helper)."""
    # One shared exp(-|x|) feeds both the sigmoid and the stable BCE term.
    e = jnp.exp(-jnp.abs(x))
    d = 1.0 + e
    inv = pl.reciprocal(d, approx=True)        # EUP vrcp seed (free slot) ...
    inv = inv * (2.0 - d * inv)                # ... + one Newton step -> ~f32 exact
    s = jnp.where(x >= 0.0, inv, e * inv)      # sigmoid(x)

    # Folded lerps (v6e/v7x have no f32 FMA, so each mul+add pair counts):
    omp = s + t * (1.0 - 2.0 * s)                        # 1 - pt
    alpha_t = (1.0 - alpha) + (2.0 * alpha - 1.0) * t    # alpha*t + (1-alpha)*(1-t)

    g = float(gamma)
    if g.is_integer() and 0 <= int(g) <= 16:
        gi = int(g)
        fw_pow = jnp.ones_like(omp) if gi == 0 else omp
        for _ in range(max(gi - 1, 0)):
            fw_pow = fw_pow * omp              # gamma=2 -> one VPU mul, no EUP pow
    else:
        fw_pow = jnp.power(jnp.maximum(omp, 0.0), g)   # generic (non-integer) gamma

    # Numerically stable BCE-with-logits, reusing e = exp(-|x|).
    bce = jnp.maximum(x, 0.0) - x * t + jnp.log1p(e)
    return (alpha_t * fw_pow) * bce


def _focal_elementwise_jnp(x, t, alpha, gamma):
    """Pure-jnp per-element focal loss (only for the <128-element ragged tail)."""
    x = x.astype(jnp.float32)
    t = t.astype(jnp.float32)
    s = jax.nn.sigmoid(x)
    omp = s + t * (1.0 - 2.0 * s)
    alpha_t = (1.0 - alpha) + (2.0 * alpha - 1.0) * t
    bce = jnp.maximum(x, 0.0) - x * t + jnp.log1p(jnp.exp(-jnp.abs(x)))
    return alpha_t * jnp.power(jnp.maximum(omp, 0.0), gamma) * bce


def _focal_sum_kernel(x_ref, t_ref, psum_ref, *, alpha, gamma, chunk_rows,
                      n_chunks, rows_valid_last, needs_mask, single_block):
    """mean/sum path: per-block (8,128) partial-sum tile, no per-element store."""

    def run_block(masked):
        def do_chunk(c):
            start = c * chunk_rows
            if not isinstance(start, int):
                start = pl.multiple_of(start, chunk_rows)
            x = x_ref[pl.ds(start, chunk_rows), :].astype(jnp.float32)
            t = t_ref[pl.ds(start, chunk_rows), :].astype(jnp.float32)
            loss = _focal_elementwise(x, t, alpha, gamma)
            if masked:
                # Per-block row bound (never a flat global index -> no i32 overflow).
                row = jax.lax.broadcasted_iota(jnp.int32, (chunk_rows, LANE), 0)
                valid = rows_valid_last - c * chunk_rows
                loss = jnp.where(row < valid, loss, 0.0)
            # Fold (chunk_rows,128) to one vreg-shaped (8,128) tile with VPU adds.
            folded = jnp.sum(
                loss.reshape(chunk_rows // SUBLANE, SUBLANE, LANE), axis=0)
            psum_ref[...] += folded

        psum_ref[...] = jnp.zeros_like(psum_ref)
        if n_chunks == 1:
            do_chunk(0)
        else:
            @pl.loop(0, n_chunks)
            def _(c):
                do_chunk(c)

    if not needs_mask:
        run_block(masked=False)
    elif single_block:
        run_block(masked=True)
    else:
        # Mask work only runs in the (single) partial last block.
        is_last = pl.program_id(0) == pl.num_programs(0) - 1

        @pl.when(jnp.logical_not(is_last))
        def _():
            run_block(masked=False)

        @pl.when(is_last)
        def _():
            run_block(masked=True)


def _focal_none_kernel(x_ref, t_ref, loss_ref, *, alpha, gamma, chunk_rows, n_chunks):
    """reduction='none': write per-element loss (partial last block is write-masked
    by the pipeline, so no in-kernel masking is needed)."""

    def do_chunk(c):
        start = c * chunk_rows
        if not isinstance(start, int):
            start = pl.multiple_of(start, chunk_rows)
        x = x_ref[pl.ds(start, chunk_rows), :].astype(jnp.float32)
        t = t_ref[pl.ds(start, chunk_rows), :].astype(jnp.float32)
        loss_ref[pl.ds(start, chunk_rows), :] = _focal_elementwise(
            x, t, alpha, gamma).astype(loss_ref.dtype)

    if n_chunks == 1:
        do_chunk(0)
    else:
        @pl.loop(0, n_chunks)
        def _(c):
            do_chunk(c)


def focal_loss(pred, target, alpha=0.25, gamma=2.0, reduction="mean"):
    """Pallas implementation of FocalLoss.forward (PyTorch semantics)."""
    if target.ndim == 3:
        target = target[:, None, :, :]
    assert pred.shape == target.shape, "pred and target must have identical shapes"
    orig_shape = pred.shape
    n = pred.size
    alpha = float(alpha)
    gamma = float(gamma)

    # Keep native (possibly narrow) dtypes in HBM; cast to f32 inside the kernel.
    x = pred.reshape(-1)
    t = target.reshape(-1)
    if not jnp.issubdtype(t.dtype, jnp.floating):
        t = t.astype(jnp.float32)  # bool/int targets only (edge case)
    out_dtype = pred.dtype if jnp.issubdtype(pred.dtype, jnp.floating) else jnp.float32

    # Lane-aligned prefix -> kernel with zero copies (contiguous reshape is free).
    # The <128-element ragged tail (rare) -> plain jnp.  No full-array jnp.pad.
    n_main = (n // LANE) * LANE
    n_tail = n - n_main
    x_main = x if n_tail == 0 else x[:n_main]   # slice only when lane-ragged
    t_main = t if n_tail == 0 else t[:n_main]

    if reduction in ("mean", "sum"):
        total = jnp.zeros((), jnp.float32)
        if n_main > 0:
            rows = n_main // LANE
            align = _row_align(x.dtype, t.dtype)
            tile_m, chunk_rows, n_chunks, num_blocks = _choose_tiling(rows, align)
            rows_valid_last = rows - (num_blocks - 1) * tile_m
            needs_mask = rows_valid_last != tile_m

            x2 = x_main.reshape(rows, LANE)
            t2 = t_main.reshape(rows, LANE)

            kernel = functools.partial(
                _focal_sum_kernel, alpha=alpha, gamma=gamma,
                chunk_rows=chunk_rows, n_chunks=n_chunks,
                rows_valid_last=rows_valid_last, needs_mask=needs_mask,
                single_block=(num_blocks == 1))

            partials = pl.pallas_call(
                kernel,
                out_shape=jax.ShapeDtypeStruct((num_blocks * SUBLANE, LANE), jnp.float32),
                grid_spec=pltpu.PrefetchScalarGridSpec(
                    num_scalar_prefetch=0,
                    grid=(num_blocks,),
                    in_specs=[pl.BlockSpec((tile_m, LANE), lambda i: (i, 0)),
                              pl.BlockSpec((tile_m, LANE), lambda i: (i, 0))],
                    out_specs=pl.BlockSpec((SUBLANE, LANE), lambda i: (i, 0)),
                ),
                compiler_params=_compiler_params(),
                cost_estimate=pl.CostEstimate(
                    flops=20 * n_main,
                    transcendentals=3 * n_main,
                    bytes_accessed=n_main * (x2.dtype.itemsize + t2.dtype.itemsize)
                                   + num_blocks * SUBLANE * LANE * 4),
            )(x2, t2)
            total = total + jnp.sum(partials)   # tiny epilogue reduce outside the kernel

        if n_tail > 0:
            total = total + jnp.sum(
                _focal_elementwise_jnp(x[n_main:], t[n_main:], alpha, gamma))

        if reduction == "mean":
            return total / jnp.float32(n)
        return total

    # reduction == 'none'
    parts = []
    if n_main > 0:
        rows = n_main // LANE
        align = _row_align(x.dtype, t.dtype, out_dtype)
        tile_m, chunk_rows, n_chunks, num_blocks = _choose_tiling(rows, align)

        x2 = x_main.reshape(rows, LANE)
        t2 = t_main.reshape(rows, LANE)

        kernel = functools.partial(_focal_none_kernel, alpha=alpha, gamma=gamma,
                                   chunk_rows=chunk_rows, n_chunks=n_chunks)
        loss2 = pl.pallas_call(
            kernel,
            out_shape=jax.ShapeDtypeStruct((rows, LANE), out_dtype),
            grid_spec=pltpu.PrefetchScalarGridSpec(
                num_scalar_prefetch=0,
                grid=(num_blocks,),
                in_specs=[pl.BlockSpec((tile_m, LANE), lambda i: (i, 0)),
                          pl.BlockSpec((tile_m, LANE), lambda i: (i, 0))],
                out_specs=pl.BlockSpec((tile_m, LANE), lambda i: (i, 0)),
            ),
            compiler_params=_compiler_params(),
            cost_estimate=pl.CostEstimate(
                flops=20 * n_main,
                transcendentals=3 * n_main,
                bytes_accessed=n_main * (x2.dtype.itemsize + t2.dtype.itemsize
                                         + jnp.dtype(out_dtype).itemsize)),
        )(x2, t2)
        parts.append(loss2.reshape(-1))
    if n_tail > 0:
        parts.append(
            _focal_elementwise_jnp(x[n_main:], t[n_main:], alpha, gamma).astype(out_dtype))
    loss_flat = parts[0] if len(parts) == 1 else jnp.concatenate(parts)
    return loss_flat.reshape(orig_shape)


def focal_loss_ref(pred, target, alpha=0.25, gamma=2.0, reduction="mean"):
    """Pure-JAX reference mirroring the PyTorch module."""
    if target.ndim == 3:
        target = target[:, None, :, :]
    pred = pred.astype(jnp.float32)
    target = target.astype(jnp.float32)
    s = jax.nn.sigmoid(pred)
    pt = s * target + (1 - s) * (1 - target)
    alpha_t = alpha * target + (1 - alpha) * (1 - target)
    fw = alpha_t * (1 - pt) ** gamma
    bce = jnp.maximum(pred, 0) - pred * target + jnp.log1p(jnp.exp(-jnp.abs(pred)))
    fl = fw * bce
    if reduction == "mean":
        return fl.mean()
    elif reduction == "sum":
        return fl.sum()
    return fl


if __name__ == "__main__":
    key = jax.random.PRNGKey(0)
    k1, k2, k3, k4, k5, k6 = jax.random.split(key, 6)

    # [B, C, H, W] = [2, 4, 16, 16]: lane-aligned, 2 blocks, no masking.
    B, C, H, W = 2, 4, 16, 16
    pred = jax.random.normal(k1, (B, C, H, W), dtype=jnp.float32) * 2.0
    target = (jax.random.uniform(k2, (B, C, H, W)) > 0.8).astype(jnp.float32)

    out = jax.block_until_ready(focal_loss(pred, target, 0.25, 2.0, "mean"))
    ref = focal_loss_ref(pred, target, 0.25, 2.0, "mean")
    assert jnp.allclose(out, ref, rtol=2e-5, atol=2e-6), (out, ref)

    out_sum = jax.block_until_ready(focal_loss(pred, target, reduction="sum"))
    ref_sum = focal_loss_ref(pred, target, reduction="sum")
    assert jnp.allclose(out_sum, ref_sum, rtol=2e-5, atol=1e-4), (out_sum, ref_sum)

    out_none = jax.block_until_ready(focal_loss(pred, target, reduction="none"))
    ref_none = focal_loss_ref(pred, target, reduction="none")
    assert out_none.shape == (B, C, H, W)
    assert jnp.allclose(out_none, ref_none, rtol=5e-5, atol=2e-6)

    # Lane-aligned but block-ragged: 24 rows -> 2 blocks of 16, last block has 8
    # valid rows -> exercises the pl.when-gated in-kernel row mask (no padding).
    pred_r = jax.random.normal(k3, (1, 1, 24, 128), dtype=jnp.float32)
    targ_r = (jax.random.uniform(k4, (1, 1, 24, 128)) > 0.7).astype(jnp.float32)
    out_r = jax.block_until_ready(focal_loss(pred_r, targ_r, reduction="mean"))
    ref_r = focal_loss_ref(pred_r, targ_r, reduction="mean")
    assert jnp.allclose(out_r, ref_r, rtol=2e-5, atol=2e-6), (out_r, ref_r)

    # 3-D target ([B, H, W] -> unsqueeze) + ragged size < 128 -> pure-jnp tail path.
    pred3 = jax.random.normal(k5, (2, 1, 7, 5), dtype=jnp.float32)
    targ3 = (jax.random.uniform(k6, (2, 7, 5)) > 0.7).astype(jnp.float32)
    out3 = jax.block_until_ready(focal_loss(pred3, targ3, reduction="mean"))
    ref3 = focal_loss_ref(pred3, targ3, reduction="mean")
    assert jnp.allclose(out3, ref3, rtol=2e-5, atol=2e-6), (out3, ref3)

    # bf16 pred streamed natively (no wrapper cast; f32 cast happens in-kernel).
    pred_bf = pred.astype(jnp.bfloat16)
    out_bf = jax.block_until_ready(focal_loss(pred_bf, target, reduction="mean"))
    ref_bf = focal_loss_ref(pred_bf, target, reduction="mean")
    assert jnp.allclose(out_bf, ref_bf, rtol=2e-5, atol=2e-6), (out_bf, ref_bf)

    print("KERNEL_OK")
</pallas_src>

<mosaic_0001>
module attributes {stable_mosaic.version = 11 : i64} {
  func.func @_focal_sum_kernel(%arg0: i32, %arg1: memref<8x128xf32, #tpu.memory_space<vmem>>, %arg2: memref<8x128xf32, #tpu.memory_space<vmem>>, %arg3: memref<8x128xf32, #tpu.memory_space<vmem>>) attributes {dimension_semantics = [#tpu.dimension_semantics<parallel>], iteration_bounds = array<i64: 2>, scalar_prefetch = 0 : i64, scratch_operands = 0 : i64, tpu.core_type = #tpu.core_type<tc>, window_params = [{transform_indices = @transform_0, window_bounds = array<i64: 8, 128>}, {transform_indices = @transform_1, window_bounds = array<i64: 8, 128>}, {transform_indices = @transform_2, window_bounds = array<i64: 8, 128>}]} {
    %cst = arith.constant 0.000000e+00 : f32
    %0 = vector.broadcast %cst : f32 to vector<8x128xf32>
    %c0 = arith.constant 0 : index
    %c0_0 = arith.constant 0 : index
    %1 = vector.load %arg3[%c0, %c0_0] : memref<8x128xf32, #tpu.memory_space<vmem>>, vector<8x128xf32>
    tpu.vector_store %arg3[%c0, %c0_0], %0 {strides = array<i32>} : memref<8x128xf32, #tpu.memory_space<vmem>>, vector<8x128xf32>,
    %c0_1 = arith.constant 0 : index
    %c0_2 = arith.constant 0 : index
    %2 = vector.load %arg1[%c0_1, %c0_2] : memref<8x128xf32, #tpu.memory_space<vmem>>, vector<8x128xf32>
    %c0_3 = arith.constant 0 : index
    %c0_4 = arith.constant 0 : index
    %3 = vector.load %arg2[%c0_3, %c0_4] : memref<8x128xf32, #tpu.memory_space<vmem>>, vector<8x128xf32>
    %4 = math.absf %2 : vector<8x128xf32>
    %cst_5 = arith.constant 0.000000e+00 : f32
    %5 = vector.broadcast %cst_5 : f32 to vector<8x128xf32>
    %6 = arith.subf %5, %4 : vector<8x128xf32>
    %7 = math.exp %6 : vector<8x128xf32>
    %cst_6 = arith.constant 1.000000e+00 : f32
    %8 = vector.broadcast %cst_6 : f32 to vector<8x128xf32>
    %9 = arith.addf %8, %7 : vector<8x128xf32>
    %10 = tpu.reciprocal %9 {approx = true} : vector<8x128xf32> -> vector<8x128xf32>
    %11 = arith.mulf %9, %10 : vector<8x128xf32>
    %cst_7 = arith.constant 2.000000e+00 : f32
    %12 = vector.broadcast %cst_7 : f32 to vector<8x128xf32>
    %13 = arith.subf %12, %11 : vector<8x128xf32>
    %14 = arith.mulf %10, %13 : vector<8x128xf32>
    %cst_8 = arith.constant 0.000000e+00 : f32
    %15 = vector.broadcast %cst_8 : f32 to vector<8x128xf32>
    %16 = arith.cmpf oge, %2, %15 : vector<8x128xf32>
    %17 = arith.mulf %7, %14 : vector<8x128xf32>
    %18 = arith.select %16, %14, %17 : vector<8x128xi1>, vector<8x128xf32>
    %cst_9 = arith.constant 2.000000e+00 : f32
    %19 = vector.broadcast %cst_9 : f32 to vector<8x128xf32>
    %20 = arith.mulf %19, %18 : vector<8x128xf32>
    %cst_10 = arith.constant 1.000000e+00 : f32
    %21 = vector.broadcast %cst_10 : f32 to vector<8x128xf32>
    %22 = arith.subf %21, %20 : vector<8x128xf32>
    %23 = arith.mulf %3, %22 : vector<8x128xf32>
    %24 = arith.addf %18, %23 : vector<8x128xf32>
    %cst_11 = arith.constant -5.000000e-01 : f32
    %25 = vector.broadcast %cst_11 : f32 to vector<8x128xf32>
    %26 = arith.mulf %25, %3 : vector<8x128xf32>
    %cst_12 = arith.constant 7.500000e-01 : f32
    %27 = vector.broadcast %cst_12 : f32 to vector<8x128xf32>
    %28 = arith.addf %27, %26 : vector<8x128xf32>
    %29 = arith.mulf %24, %24 : vector<8x128xf32>
    %cst_13 = arith.constant 0.000000e+00 : f32
    %30 = vector.broadcast %cst_13 : f32 to vector<8x128xf32>
    %31 = arith.maximumf %2, %30 : vector<8x128xf32>
    %32 = arith.mulf %2, %3 : vector<8x128xf32>
    %33 = arith.subf %31, %32 : vector<8x128xf32>
    %34 = math.log1p %7 : vector<8x128xf32>
    %35 = arith.addf %33, %34 : vector<8x128xf32>
    %36 = arith.mulf %28, %29 : vector<8x128xf32>
    %37 = arith.mulf %36, %35 : vector<8x128xf32>
    %38 = vector.shape_cast %37 : vector<8x128xf32> to vector<1x8x128xf32>
    %cst_14 = arith.constant dense<0.000000e+00> : vector<8x128xf32>
    %39 = vector.multi_reduction <add>, %38, %cst_14 [0] : vector<1x8x128xf32> to vector<8x128xf32>
    %c0_15 = arith.constant 0 : index
    %c0_16 = arith.constant 0 : index
    %40 = vector.load %arg3[%c0_15, %c0_16] : memref<8x128xf32, #tpu.memory_space<vmem>>, vector<8x128xf32>
    %41 = arith.addf %40, %39 : vector<8x128xf32>
    %c0_17 = arith.constant 0 : index
    %c0_18 = arith.constant 0 : index
    %42 = vector.load %arg3[%c0_17, %c0_18] : memref<8x128xf32, #tpu.memory_space<vmem>>, vector<8x128xf32>
    tpu.vector_store %arg3[%c0_17, %c0_18], %41 {strides = array<i32>} : memref<8x128xf32, #tpu.memory_space<vmem>>, vector<8x128xf32>,
    return
  }
  func.func @transform_0(%arg0: i32) -> (i32, i32) {
    %c0_i32 = arith.constant 0 : i32
    %c0_i32_0 = arith.constant 0 : i32
    return %arg0, %c0_i32 : i32, i32
  }
  func.func @transform_1(%arg0: i32) -> (i32, i32) {
    %c0_i32 = arith.constant 0 : i32
    %c0_i32_0 = arith.constant 0 : i32
    return %arg0, %c0_i32 : i32, i32
  }
  func.func @transform_2(%arg0: i32) -> (i32, i32) {
    %c0_i32 = arith.constant 0 : i32
    %c0_i32_0 = arith.constant 0 : i32
    return %arg0, %c0_i32 : i32, i32
  }
}

</mosaic_0001>

<llo_original>
// kernel: tpu_custom_call.1
$region0: #{tpu_custom_call.1}
  #allocation0 [shape = 'u32[]', space=smem, size = 0x4, offset = 0x4, fixed_abs, tag = 'smem constant byte address 0x4 - core index']
  #allocation1 [shape = 'u32[72,128]{1,0:T(1,128)}', space=vmem, size = 0x9000, scoped, tag = 'internal scratch']
  %s0 = inlined_call_operand.hbm [shape: f32[16,128], index: 0, kind: input, shape index: {}]
  %s1 = inlined_call_operand.hbm [shape: f32[16,128], index: 1, kind: input, shape index: {}]
  %s2 = inlined_call_operand.hbm [shape: f32[16,128], index: 2, kind: output, shape index: {}]
  %s3 = sld [smem:[#allocation0]]
  $region49: #{tpu_custom_call.1} parent=0
    _
  %s5 = ssub.s32 1, %s3
  %s6 = scalar_select 0, %s5, %s3
  $region1: #{tpu_custom_call.1} parent=0
    #allocation2 [shape = 'u8[8192]{0}', space=vmem, size = 0x2000, scoped, tag = 'input window, operand 0']
    #allocation3 [shape = 's32[2]{0}', space=sflag, size = 0x8, scoped, tag = 'scoped memory for tpu_custom_call.1']
    #allocation4 [shape = 's32[2]{0}', space=sflag, size = 0x8, scoped, tag = 'scoped memory for tpu_custom_call.1']
    #allocation5 [shape = 'u8[8192]{0}', space=vmem, size = 0x2000, scoped, tag = 'input window, operand 1']
    #allocation6 [shape = 's32[2]{0}', space=sflag, size = 0x8, scoped, tag = 'scoped memory for tpu_custom_call.1']
    #allocation7 [shape = 'u8[8192]{0}', space=vmem, size = 0x2000, scoped, tag = 'output window, operand 0']
    %7 = vsyncpa [#allocation3], 0
    %s8 = scalar_lea.sflag [#allocation3], 1
    %9 = vsyncpa %s8, 0
    %10 = vsyncpa [#allocation6], 0
    %s11 = scalar_lea.sflag [#allocation6], 1
    %12 = vsyncpa %s11, 0
    %13 = vsyncpa [#allocation4], 0
    %s14 = scalar_lea.sflag [#allocation4], 1
    %15 = vsyncpa %s14, 0
    loop: start=0, step=1, limit=4
    $region2: #{tpu_custom_call.1} parent=1 // loop_pre_header
      _
    $region3: #{tpu_custom_call.1} parent=1 // loop_header
      %s17 = sphi 0, %s21
      %p18 = scmp.ge.s32.totalorder %s17, 4
      %s27 = sphi 0, %s29
      %s30 = sphi 0, %s27
      %s31 = sphi 0, %s30
      %s47 = sphi 0, %s31
      %s53 = sphi 0, %s55
      %s56 = sphi 0, %s53
      %s57 = sphi 0, %s56
      %s73 = sphi 0, %s57
      %s79 = sphi 0, %s81
      %s82 = sphi 0, %s79
      %s83 = sphi 0, %s82
      %s99 = sphi 0, %s83
    $region4: #{tpu_custom_call.1} parent=1 // loop_header_branch
      %20 = sbr.rel (%p18) target = $region8
    $region5: #{tpu_custom_call.1} parent=1 // loop_body
      %s22 = ssub.s32 %s17, 1
      %s23 = ssub.s32 %s17, 2
      %s24 = sadd.s32 %s17, 1
      %s25 = ssub.s32 %s17, %s24
      %p26 = scmp.eq.s32.totalorder %s25, 0
      %s28 = sadd.s32 %s27, 1
      %s29 = scalar_select %p26, %s27, %s28
      %p32 = pneg %p26
      %p33 = scmp.eq.s32.totalorder %s17, 1
      %p34 = por %p32, %p33
      %p35 = scmp.ne.s32.totalorder %s27, %s30
      %p36 = scmp.eq.s32.totalorder %s17, 0
      %p37 = por %p35, %p36
      %p38 = scmp.ne.s32.totalorder %s27, %s30
      %p39 = scmp.eq.s32.totalorder %s22, 1
      %p40 = por %p38, %p39
      %p41 = scmp.ne.s32.totalorder %s30, %s31
      %p42 = scmp.eq.s32.totalorder %s22, 0
      %p43 = por %p41, %p42
      %p44 = scmp.ne.s32.totalorder %s30, %s31
      %p45 = scmp.eq.s32.totalorder %s23, 1
      %p46 = por %p44, %p45
      %p48 = scmp.ne.s32.totalorder %s31, %s47
      %p49 = scmp.eq.s32.totalorder %s23, 0
      %p50 = por %p48, %p49
      %s51 = ssub.s32 %s17, %s24
      %p52 = scmp.eq.s32.totalorder %s51, 0
      %s54 = sadd.s32 %s53, 1
      %s55 = scalar_select %p52, %s53, %s54
      %p58 = pneg %p52
      %p59 = scmp.eq.s32.totalorder %s17, 1
      %p60 = por %p58, %p59
      %p61 = scmp.ne.s32.totalorder %s53, %s56
      %p62 = scmp.eq.s32.totalorder %s17, 0
      %p63 = por %p61, %p62
      %p64 = scmp.ne.s32.totalorder %s53, %s56
      %p65 = scmp.eq.s32.totalorder %s22, 1
      %p66 = por %p64, %p65
      %p67 = scmp.ne.s32.totalorder %s56, %s57
      %p68 = scmp.eq.s32.totalorder %s22, 0
      %p69 = por %p67, %p68
      %p70 = scmp.ne.s32.totalorder %s56, %s57
      %p71 = scmp.eq.s32.totalorder %s23, 1
      %p72 = por %p70, %p71
      %p74 = scmp.ne.s32.totalorder %s57, %s73
      %p75 = scmp.eq.s32.totalorder %s23, 0
      %p76 = por %p74, %p75
      %s77 = ssub.s32 %s17, %s24
      %p78 = scmp.eq.s32.totalorder %s77, 0
      %s80 = sadd.s32 %s79, 1
      %s81 = scalar_select %p78, %s79, %s80
      %p84 = pneg %p78
      %p85 = scmp.eq.s32.totalorder %s17, 1
      %p86 = por %p84, %p85
      %p87 = scmp.ne.s32.totalorder %s79, %s82
      %p88 = scmp.eq.s32.totalorder %s17, 0
      %p89 = por %p87, %p88
      %p90 = scmp.ne.s32.totalorder %s79, %s82
      %p91 = scmp.eq.s32.totalorder %s22, 1
      %p92 = por %p90, %p91
      %p93 = scmp.ne.s32.totalorder %s82, %s83
      %p94 = scmp.eq.s32.totalorder %s22, 0
      %p95 = por %p93, %p94
      %p96 = scmp.ne.s32.totalorder %s82, %s83
      %p97 = scmp.eq.s32.totalorder %s23, 1
      %p98 = por %p96, %p97
      %p100 = scmp.ne.s32.totalorder %s83, %s99
      %p101 = scmp.eq.s32.totalorder %s23, 0
      %p102 = por %p100, %p101
      %p103 = scmp.le.s32.totalorder 1, %s17
      %p104 = scmp.lt.s32.totalorder %s17, 3
      %p105 = pnand %p103, %p104
      %p106 = pneg %p105
      // Predicated region
      $region9: #{tpu_custom_call.1} parent=5 // pred_check
        _
      $region10: #{tpu_custom_call.1} parent=5 // pred_check_branch
        %108 = sbr.rel (%p105) target = $region12
      $region11: #{tpu_custom_call.1} parent=5 // pred_region
        %s109 = ssub.s32 %s17, 1
      $region12: #{tpu_custom_call.1} parent=5 // pred_fallthru
        _
      %p110 = scmp.lt.s32.totalorder %s17, 2
      // Predicated region
      $region13: #{tpu_custom_call.1} parent=5 // pred_check
        %p111 = pneg %p110
      $region14: #{tpu_custom_call.1} parent=5 // pred_check_branch
        %113 = sbr.rel (%p111) target = $region16
      $region15: #{tpu_custom_call.1} parent=5 // pred_region
        // Predicated region
        $region17: #{tpu_custom_call.1} parent=15 // pred_check
          %p114 = pneg %p37
        $region18: #{tpu_custom_call.1} parent=15 // pred_check_branch
          %116 = sbr.rel (%p114) target = $region20
        $region19: #{tpu_custom_call.1} parent=15 // pred_region
          %s117 = sand.u32 %s27, 1
          %s118 = scalar_lea.sflag [#allocation3], %s117
          %s119 = sand.u32 %s27, 1
          %s120 = smul.addr %s119, 8
          %s121 = scalar_lea.vmem [#allocation2], %s120
          %123 = vsyncadd %s118, 0
          %s124 = smul.addr %s17, 8
          %s125 = scalar_lea.hbm %s0, %s124
          %s127 = sshll.u32 %s125, 4
          %s128 = int_to_ptr.hbm [resolvable:$true] %s127
          %s129 = sshll.u32 %s121, 4
          %s130 = int_to_ptr.vmem [resolvable:$true] %s129
          %132 = dma.hbm_to_vmem [thread:$0]  %s128, 128, %s130, %s118
        $region20: #{tpu_custom_call.1} parent=15 // pred_fallthru
          _
        // Predicated region
        $region21: #{tpu_custom_call.1} parent=15 // pred_check
          %p133 = pneg %p63
        $region22: #{tpu_custom_call.1} parent=15 // pred_check_branch
          %135 = sbr.rel (%p133) target = $region24
        $region23: #{tpu_custom_call.1} parent=15 // pred_region
          %s136 = sand.u32 %s53, 1
          %s137 = scalar_lea.sflag [#allocation6], %s136
          %s138 = sand.u32 %s53, 1
          %s139 = smul.addr %s138, 8
          %s140 = scalar_lea.vmem [#allocation5], %s139
          %142 = vsyncadd %s137, 0
          %s143 = smul.addr %s17, 8
          %s144 = scalar_lea.hbm %s1, %s143
          %s146 = sshll.u32 %s144, 4
          %s147 = int_to_ptr.hbm [resolvable:$true] %s146
          %s148 = sshll.u32 %s140, 4
          %s149 = int_to_ptr.vmem [resolvable:$true] %s148
          %151 = dma.hbm_to_vmem [thread:$0]  %s147, 128, %s149, %s137
        $region24: #{tpu_custom_call.1} parent=15 // pred_fallthru
          _
      $region16: #{tpu_custom_call.1} parent=5 // pred_fallthru
        _
      %p152 = scmp.le.s32.totalorder 1, %s17
      %p153 = scmp.lt.s32.totalorder %s17, 3
      %p154 = pnand %p152, %p153
      %p155 = pneg %p154
      // Predicated region
      $region25: #{tpu_custom_call.1} parent=5 // pred_check
        _
      $region26: #{tpu_custom_call.1} parent=5 // pred_check_branch
        %157 = sbr.rel (%p154) target = $region28
      $region27: #{tpu_custom_call.1} parent=5 // pred_region
        %s158 = ssub.s32 %s17, 1
        %s159 = sand.u32 %s30, 1
        %s160 = scalar_lea.sflag [#allocation3], %s159
        %s161 = sand.u32 %s30, 1
        %s162 = smul.addr %s161, 8
        %s163 = scalar_lea.vmem [#allocation2], %s162
        // Predicated region
        $region29: #{tpu_custom_call.1} parent=27 // pred_check
          %p164 = pneg %p43
        $region30: #{tpu_custom_call.1} parent=27 // pred_check_branch
          %166 = sbr.rel (%p164) target = $region32
        $region31: #{tpu_custom_call.1} parent=27 // pred_region
          %168 = dma.done %s160, 128
        $region32: #{tpu_custom_call.1} parent=27 // pred_fallthru
          _
        %s169 = sand.u32 %s56, 1
        %s170 = scalar_lea.sflag [#allocation6], %s169
        %s171 = sand.u32 %s56, 1
        %s172 = smul.addr %s171, 8
        %s173 = scalar_lea.vmem [#allocation5], %s172
        // Predicated region
        $region33: #{tpu_custom_call.1} parent=27 // pred_check
          %p174 = pneg %p69
        $region34: #{tpu_custom_call.1} parent=27 // pred_check_branch
          %176 = sbr.rel (%p174) target = $region36
        $region35: #{tpu_custom_call.1} parent=27 // pred_region
          %178 = dma.done %s170, 128
        $region36: #{tpu_custom_call.1} parent=27 // pred_fallthru
          _
        %s179 = sand.u32 %s30, 1
        %s180 = scalar_lea.sflag [#allocation3], %s179
        %s181 = sand.u32 %s30, 1
        %s182 = smul.addr %s181, 8
        %s183 = scalar_lea.vmem [#allocation2], %s182
        %p184 = pneg %p43
        %p185 = pneg %p40
        %s186 = sand.u32 %s56, 1
        %s187 = scalar_lea.sflag [#allocation6], %s186
        %s188 = sand.u32 %s56, 1
        %s189 = smul.addr %s188, 8
        %s190 = scalar_lea.vmem [#allocation5], %s189
        %p191 = pneg %p69
        %p192 = pneg %p66
        %p193 = pneg %p95
        %p194 = pneg %p92
        %s195 = sand.u32 %s82, 1
        %s196 = scalar_lea.sflag [#allocation4], %s195
        %s197 = sand.u32 %s82, 1
        %s198 = smul.addr %s197, 8
        %s199 = scalar_lea.vmem [#allocation7], %s198
        %200 = vst [vmem:[%s199] sm:$0xff] 0.0
        %v201 = vld [vmem:[%s163] sm:$0xff]
        %v202 = vld [vmem:[%s173] sm:$0xff]
        %v203 = vand.u32 2147483647, %v201
        %v204 = vsub.f32 0.0, %v203
        %v205 = vmul.f32 %v204, 1.442695
        %v206 = vpow.pop %v205
        %v207 = vadd.f32 %v206, 1.0
        %v208 = vrcp.pop %v207
        %v209 = vmul.f32 %v207, %v208
        %v210 = vsub.f32 2.0, %v209
        %v211 = vmul.f32 %v208, %v210
        %vm212 = vcmp.ge.f32.partialorder %v201, 0.0
        %v213 = vmul.f32 %v206, %v211
        %v214 = vsel %vm212, %v211, %v213
        %v215 = vmul.f32 %v214, 2.0
        %v216 = vsub.f32 1.0, %v215
        %v217 = vmul.f32 %v202, %v216
        %v218 = vadd.f32 %v214, %v217
        %v219 = vmul.f32 %v202, -0.5
        %v220 = vadd.f32 %v219, 0.75
        %v221 = vmul.f32 %v218, %v218
        %v222 = vmax.f32 %v201, 0.0
        %v223 = vmul.f32 %v201, %v202
        %v224 = vsub.f32 %v222, %v223
        %v225 = vadd.f32 %v206, 1.0
        %v226 = vlog2.pop %v225
        %v227 = vmul.f32 %v226, 0.6931472
        %v228 = vmul.f32 -0.5, %v206
        %v229 = vadd.f32 %v228, 1.0
        %v230 = vmul.f32 %v229, %v206
        %v231 = vand.u32 2147483647, %v206
        %vm232 = vcmp.lt.f32.partialorder %v231, 0.0004427343
        %v233 = vsel %vm232, %v230, %v227
        %v234 = vadd.f32 %v224, %v233
        %v235 = vmul.f32 %v220, %v221
        %v236 = vmul.f32 %v235, %v234
        %v237 = vadd.f32 %v236, 0.0
        %v238 = vld [vmem:[%s199] sm:$0xff]
        %v239 = vadd.f32 %v238, %v237
        %240 = vst [vmem:[%s199] sm:$0xff] %v239
        %s241 = sand.u32 %s82, 1
        %s242 = scalar_lea.sflag [#allocation4], %s241
        %s243 = sand.u32 %s82, 1
        %s244 = smul.addr %s243, 8
        %s245 = scalar_lea.vmem [#allocation7], %s244
        // Predicated region
        $region37: #{tpu_custom_call.1} parent=27 // pred_check
          %p246 = pneg %p92
        $region38: #{tpu_custom_call.1} parent=27 // pred_check_branch
          %248 = sbr.rel (%p246) target = $region40
        $region39: #{tpu_custom_call.1} parent=27 // pred_region
          %250 = vsyncadd %s242, 0
          %s251 = smul.addr %s22, 8
          %s252 = scalar_lea.hbm %s2, %s251
          %s254 = sshll.u32 %s245, 4
          %s255 = int_to_ptr.vmem [resolvable:$true] %s254
          %s256 = sshll.u32 %s252, 4
          %s257 = int_to_ptr.hbm [resolvable:$true] %s256
          %259 = dma.vmem_to_hbm [thread:$0]  %s255, 128, %s257, %s242
        $region40: #{tpu_custom_call.1} parent=27 // pred_fallthru
          _
      $region28: #{tpu_custom_call.1} parent=5 // pred_fallthru
        _
      %p260 = scmp.le.s32.totalorder 2, %s17
      // Predicated region
      $region41: #{tpu_custom_call.1} parent=5 // pred_check
        %p261 = pneg %p260
      $region42: #{tpu_custom_call.1} parent=5 // pred_check_branch
        %263 = sbr.rel (%p261) target = $region44
      $region43: #{tpu_custom_call.1} parent=5 // pred_region
        %s264 = ssub.s32 %s17, 2
        // Predicated region
        $region45: #{tpu_custom_call.1} parent=43 // pred_check
          %p265 = pneg %p98
        $region46: #{tpu_custom_call.1} parent=43 // pred_check_branch
          %267 = sbr.rel (%p265) target = $region48
        $region47: #{tpu_custom_call.1} parent=43 // pred_region
          %s268 = sand.u32 %s83, 1
          %s269 = scalar_lea.sflag [#allocation4], %s268
          %s270 = sand.u32 %s83, 1
          %s271 = smul.addr %s270, 8
          %s272 = scalar_lea.vmem [#allocation7], %s271
          %274 = dma.done %s269, 128
        $region48: #{tpu_custom_call.1} parent=43 // pred_fallthru
          _
      $region44: #{tpu_custom_call.1} parent=5 // pred_fallthru
        _
    $region6: #{tpu_custom_call.1} parent=1 // loop_footer
      %s21 = sadd.s32 1, %s17
    $region7: #{tpu_custom_call.1} parent=1 // loop_footer_branch
      %16 = sbr.rel target = $region3
    $region8: #{tpu_custom_call.1} parent=1 // loop_exit
      _
    %275 = vsyncpa [#allocation3], 1
    %s276 = scalar_lea.sflag [#allocation3], 1
    %277 = vsyncpa %s276, 1
    %278 = vsyncpa [#allocation6], 1
    %s279 = scalar_lea.sflag [#allocation6], 1
    %280 = vsyncpa %s279, 1
    %281 = vsyncpa [#allocation4], 1
    %s282 = scalar_lea.sflag [#allocation4], 1
    %283 = vsyncpa %s282, 1

</llo_original>
